<compile_context>
chip_gen: v6e
topology: v6e:2x2x1
jax: 0.10.0
libtpu: 0.0.40
codegen_flags: <defaults>
</compile_context>

<pallas_src>
import math
import jax
import jax.numpy as jnp
from jax import lax
from jax.experimental import pallas as pl
from jax.experimental.pallas import tpu as pltpu


def _pick_tq(S: int) -> int:
    """Largest query-tile (<=128) that divides S; fall back to full S."""
    for t in (128, 64, 32, 16, 8):
        if S % t == 0:
            return t
    return S


def _make_attn_kernel(tq: int, hp: int, scale: float, compute_dtype):
    def attn_kernel(x_ref, wqkv_ref, bqkv_ref, o_ref, q_sc, k_sc, v_sc):
        qi = pl.program_id(1)

        # ---- once per batch: fused QKV projection into persistent scratch ----
        @pl.when(qi == 0)
        def _():
            x = x_ref[...]                                    # (S, E) bf16
            qkv = jnp.dot(x, wqkv_ref[...],
                          preferred_element_type=jnp.float32)  # (S, 3*Hp) f32
            qkv = qkv + bqkv_ref[...]                          # bias (1, 3*Hp)
            q_sc[...] = qkv[:, :hp].astype(compute_dtype)
            k_sc[...] = qkv[:, hp:2 * hp].astype(compute_dtype)
            v_sc[...] = qkv[:, 2 * hp:].astype(compute_dtype)

        # ---- per q-tile: (TQ, S) score block ----
        row0 = pl.multiple_of(qi * tq, tq)
        q = q_sc[pl.ds(row0, tq), :]                           # (TQ, Hp)

        # contract head dims directly: q @ k^T without materializing k.T
        s = lax.dot_general(q, k_sc[...], (((1,), (1,)), ((), ())),
                            preferred_element_type=jnp.float32) * scale  # (TQ, S)

        # numerically stable softmax in f32
        s = s - jnp.max(s, axis=-1, keepdims=True)
        p = jnp.exp(s)
        inv = pl.reciprocal(jnp.sum(p, axis=-1, keepdims=True), approx=True)
        a = p * inv

        out = jnp.dot(a.astype(compute_dtype), v_sc[...],
                      preferred_element_type=jnp.float32)      # (TQ, Hp)
        o_ref[...] = out.astype(o_ref.dtype)

    return attn_kernel


def one_head_attention(x, wq, bq, wk, bk, wv, bv, *, compute_dtype=jnp.bfloat16):
    """x: [B, S, E]; wq/wk/wv: [E, H]; bq/bk/bv: [H] (or [1, H]) -> [B, S, H]."""
    B, S, E = x.shape
    H = wq.shape[1]
    out_dtype = x.dtype
    scale = 1.0 / math.sqrt(float(H))

    # Pad head dim to a multiple of 128 so the output last dim is lane-dense.
    Hp = ((H + 127) // 128) * 128
    pad_w = lambda w: jnp.pad(w, ((0, 0), (0, Hp - H)))
    pad_b = lambda b: jnp.pad(jnp.reshape(b, (-1,)), (0, Hp - H))

    wqkv = jnp.concatenate([pad_w(wq), pad_w(wk), pad_w(wv)], axis=1)       # (E, 3*Hp)
    bqkv = jnp.concatenate([pad_b(bq), pad_b(bk), pad_b(bv)])[None, :]      # (1, 3*Hp)

    # bf16 MXU inputs, f32 accumulation; bias stays f32 (added post-accumulate).
    x_c = x.astype(compute_dtype)
    wqkv = wqkv.astype(compute_dtype)
    bqkv = bqkv.astype(jnp.float32)

    TQ = _pick_tq(S)
    nq = S // TQ
    kernel = _make_attn_kernel(TQ, Hp, scale, compute_dtype)

    out = pl.pallas_call(
        kernel,
        out_shape=jax.ShapeDtypeStruct((B, S, Hp), out_dtype),
        grid=(B, nq),
        in_specs=[
            # full sequence of one batch (re-DMA'd only when the batch changes)
            pl.BlockSpec((pl.Squeezed(), S, E), lambda b, q: (b, 0, 0)),
            pl.BlockSpec((E, 3 * Hp), lambda b, q: (0, 0)),   # fused QKV weight
            pl.BlockSpec((1, 3 * Hp), lambda b, q: (0, 0)),   # fused QKV bias
        ],
        out_specs=pl.BlockSpec((pl.Squeezed(), TQ, Hp), lambda b, q: (b, q, 0)),
        scratch_shapes=[
            pltpu.VMEM((S, Hp), compute_dtype),   # Q (whole sequence)
            pltpu.VMEM((S, Hp), compute_dtype),   # K
            pltpu.VMEM((S, Hp), compute_dtype),   # V
        ],
        compiler_params=pltpu.CompilerParams(
            # batch axis -> megacore; q-tile axis sequential so the K/V scratch
            # computed at q==0 is valid for the rest of the batch.
            dimension_semantics=("parallel", "arbitrary"),
        ),
    )(x_c, wqkv, bqkv)

    return out[..., :H] if Hp != H else out


def reference_attention(x, wq, bq, wk, bk, wv, bv):
    """Pure-JAX f32 reference mirroring the PyTorch forward."""
    H = wq.shape[1]
    q = jnp.einsum("bse,eh->bsh", x, wq) + jnp.reshape(bq, (-1,))
    k = jnp.einsum("bse,eh->bsh", x, wk) + jnp.reshape(bk, (-1,))
    v = jnp.einsum("bse,eh->bsh", x, wv) + jnp.reshape(bv, (-1,))
    qk = jnp.einsum("bqh,bkh->bqk", q, k) / math.sqrt(float(H))
    a = jax.nn.softmax(qk, axis=-1)
    return jnp.einsum("bqk,bkh->bqh", a, v)


def _run_case(B, S, E, H, seed):
    key = jax.random.PRNGKey(seed)
    kx, kq, kbq, kk, kbk, kv, kbv = jax.random.split(key, 7)
    bound = 1.0 / math.sqrt(E)
    x = jax.random.normal(kx, (B, S, E), dtype=jnp.float32)
    wq = jax.random.uniform(kq, (E, H), jnp.float32, -bound, bound)
    bq = jax.random.uniform(kbq, (H,), jnp.float32, -bound, bound)
    wk = jax.random.uniform(kk, (E, H), jnp.float32, -bound, bound)
    bk = jax.random.uniform(kbk, (H,), jnp.float32, -bound, bound)
    wv = jax.random.uniform(kv, (E, H), jnp.float32, -bound, bound)
    bv = jax.random.uniform(kbv, (H,), jnp.float32, -bound, bound)

    out = one_head_attention(x, wq, bq, wk, bk, wv, bv)
    out = jax.block_until_ready(out)
    ref = reference_attention(x, wq, bq, wk, bk, wv, bv)

    assert out.shape == (B, S, H)
    # bf16 MXU inputs with f32 accumulation + approx reciprocal -> loosened tol.
    err = float(jnp.max(jnp.abs(out - ref)))
    assert jnp.allclose(out, ref, atol=2e-2, rtol=2e-2), (
        f"mismatch vs reference (max abs err {err:.3e})")


if __name__ == "__main__":
    # Small shape matching the module (batch=2, seq=8, e_dim=32, h_dim=32).
    _run_case(B=2, S=8, E=32, H=32, seed=0)
    # Slightly larger case exercising the query-tiling path (nq > 1).
    _run_case(B=2, S=256, E=128, H=64, seed=0)
    print("KERNEL_OK")
</pallas_src>

<mosaic_0001>
module attributes {stable_mosaic.version = 11 : i64} {
  func.func @attn_kernel(%arg0: i32, %arg1: i32, %arg2: memref<1x8x32xbf16, #tpu.memory_space<vmem>>, %arg3: memref<32x384xbf16, #tpu.memory_space<vmem>>, %arg4: memref<1x384xf32, #tpu.memory_space<vmem>>, %arg5: memref<1x8x128xf32, #tpu.memory_space<vmem>>, %arg6: memref<8x128xbf16, #tpu.memory_space<vmem>>, %arg7: memref<8x128xbf16, #tpu.memory_space<vmem>>, %arg8: memref<8x128xbf16, #tpu.memory_space<vmem>>) attributes {dimension_semantics = [#tpu.dimension_semantics<parallel>, #tpu.dimension_semantics<arbitrary>], iteration_bounds = array<i64: 2, 1>, scalar_prefetch = 0 : i64, scratch_operands = 3 : i64, tpu.core_type = #tpu.core_type<tc>, window_params = [{transform_indices = @transform_0, window_bounds = array<i64: 1, 8, 32>}, {pipeline_mode = #tpu.pipeline_mode<synchronous>, transform_indices = @transform_1, window_bounds = array<i64: 32, 384>}, {pipeline_mode = #tpu.pipeline_mode<synchronous>, transform_indices = @transform_2, window_bounds = array<i64: 1, 384>}, {transform_indices = @transform_3, window_bounds = array<i64: 1, 8, 128>}]} {
    %c0_i32 = arith.constant 0 : i32
    %0 = arith.cmpi eq, %arg1, %c0_i32 : i32
    %1 = arith.extui %0 : i1 to i32
    %c0_i32_0 = arith.constant 0 : i32
    %2 = arith.cmpi ne, %1, %c0_i32_0 : i32
    scf.if %2 {
      %c0_12 = arith.constant 0 : index
      %c0_13 = arith.constant 0 : index
      %c0_14 = arith.constant 0 : index
      %27 = vector.load %arg2[%c0_12, %c0_13, %c0_14] : memref<1x8x32xbf16, #tpu.memory_space<vmem>>, vector<1x8x32xbf16>
      %28 = vector.shape_cast %27 : vector<1x8x32xbf16> to vector<8x32xbf16>
      %c0_15 = arith.constant 0 : index
      %c0_16 = arith.constant 0 : index
      %29 = vector.load %arg3[%c0_15, %c0_16] : memref<32x384xbf16, #tpu.memory_space<vmem>>, vector<32x384xbf16>
      %cst_17 = arith.constant dense<0.000000e+00> : vector<8x384xf32>
      %30 = tpu.matmul %28, %29, %cst_17 {dimension_numbers = #tpu.dot_dimension_numbers<[1], [0], [0], [1], [0, 0, 1, 1], [], []>} : vector<8x32xbf16>, vector<32x384xbf16>, vector<8x384xf32> -> vector<8x384xf32>
      %c0_18 = arith.constant 0 : index
      %c0_19 = arith.constant 0 : index
      %31 = vector.load %arg4[%c0_18, %c0_19] : memref<1x384xf32, #tpu.memory_space<vmem>>, vector<1x384xf32>
      %32 = vector.broadcast %31 : vector<1x384xf32> to vector<8x384xf32>
      %33 = arith.addf %30, %32 : vector<8x384xf32>
      %34 = vector.extract_strided_slice %33 {offsets = [0, 0], sizes = [8, 128], strides = [1, 1]} : vector<8x384xf32> to vector<8x128xf32>
      %35 = arith.truncf %34 : vector<8x128xf32> to vector<8x128xbf16>
      %c0_20 = arith.constant 0 : index
      %c0_21 = arith.constant 0 : index
      %36 = vector.load %arg6[%c0_20, %c0_21] : memref<8x128xbf16, #tpu.memory_space<vmem>>, vector<8x128xbf16>
      tpu.vector_store %arg6[%c0_20, %c0_21], %35 {strides = array<i32>} : memref<8x128xbf16, #tpu.memory_space<vmem>>, vector<8x128xbf16>,
      %37 = vector.extract_strided_slice %33 {offsets = [0, 128], sizes = [8, 128], strides = [1, 1]} : vector<8x384xf32> to vector<8x128xf32>
      %38 = arith.truncf %37 : vector<8x128xf32> to vector<8x128xbf16>
      %c0_22 = arith.constant 0 : index
      %c0_23 = arith.constant 0 : index
      %39 = vector.load %arg7[%c0_22, %c0_23] : memref<8x128xbf16, #tpu.memory_space<vmem>>, vector<8x128xbf16>
      tpu.vector_store %arg7[%c0_22, %c0_23], %38 {strides = array<i32>} : memref<8x128xbf16, #tpu.memory_space<vmem>>, vector<8x128xbf16>,
      %40 = vector.extract_strided_slice %33 {offsets = [0, 256], sizes = [8, 128], strides = [1, 1]} : vector<8x384xf32> to vector<8x128xf32>
      %41 = arith.truncf %40 : vector<8x128xf32> to vector<8x128xbf16>
      %c0_24 = arith.constant 0 : index
      %c0_25 = arith.constant 0 : index
      %42 = vector.load %arg8[%c0_24, %c0_25] : memref<8x128xbf16, #tpu.memory_space<vmem>>, vector<8x128xbf16>
      tpu.vector_store %arg8[%c0_24, %c0_25], %41 {strides = array<i32>} : memref<8x128xbf16, #tpu.memory_space<vmem>>, vector<8x128xbf16>,
    } else {
    }
    %c8_i32 = arith.constant 8 : i32
    %3 = arith.muli %arg1, %c8_i32 : i32
    %4 = tpu.assume_multiple %3, 8 : i32
    %5 = arith.index_cast %4 : i32 to index
    %c0 = arith.constant 0 : index
    %6 = vector.load %arg6[%5, %c0] : memref<8x128xbf16, #tpu.memory_space<vmem>>, vector<8x128xbf16>
    %c0_1 = arith.constant 0 : index
    %c0_2 = arith.constant 0 : index
    %7 = vector.load %arg7[%c0_1, %c0_2] : memref<8x128xbf16, #tpu.memory_space<vmem>>, vector<8x128xbf16>
    %cst = arith.constant dense<0.000000e+00> : vector<8x8xf32>
    %8 = tpu.matmul %6, %7, %cst {dimension_numbers = #tpu.dot_dimension_numbers<[1], [1], [0], [0], [0, 0, 1, 0], [], []>} : vector<8x128xbf16>, vector<8x128xbf16>, vector<8x8xf32> -> vector<8x8xf32>
    %cst_3 = arith.constant 0.176776692 : f32
    %9 = vector.broadcast %cst_3 : f32 to vector<8x8xf32>
    %10 = arith.mulf %8, %9 : vector<8x8xf32>
    %cst_4 = arith.constant dense<0xFF800000> : vector<8xf32>
    %11 = vector.multi_reduction <maximumf>, %10, %cst_4 [1] : vector<8x8xf32> to vector<8xf32>
    %12 = vector.shape_cast %11 : vector<8xf32> to vector<8x1xf32>
    %13 = vector.broadcast %12 : vector<8x1xf32> to vector<8x8xf32>
    %14 = arith.subf %10, %13 : vector<8x8xf32>
    %15 = math.exp %14 : vector<8x8xf32>
    %cst_5 = arith.constant dense<0.000000e+00> : vector<8xf32>
    %16 = vector.multi_reduction <add>, %15, %cst_5 [1] : vector<8x8xf32> to vector<8xf32>
    %17 = vector.shape_cast %16 : vector<8xf32> to vector<8x1xf32>
    %18 = tpu.reciprocal %17 {approx = true} : vector<8x1xf32> -> vector<8x1xf32>
    %19 = vector.broadcast %18 : vector<8x1xf32> to vector<8x8xf32>
    %20 = arith.mulf %15, %19 : vector<8x8xf32>
    %21 = arith.truncf %20 : vector<8x8xf32> to vector<8x8xbf16>
    %c0_6 = arith.constant 0 : index
    %c0_7 = arith.constant 0 : index
    %22 = vector.load %arg8[%c0_6, %c0_7] : memref<8x128xbf16, #tpu.memory_space<vmem>>, vector<8x128xbf16>
    %cst_8 = arith.constant dense<0.000000e+00> : vector<8x128xf32>
    %23 = tpu.matmul %21, %22, %cst_8 {dimension_numbers = #tpu.dot_dimension_numbers<[1], [0], [0], [1], [0, 0, 1, 1], [], []>} : vector<8x8xbf16>, vector<8x128xbf16>, vector<8x128xf32> -> vector<8x128xf32>
    %c0_9 = arith.constant 0 : index
    %c0_10 = arith.constant 0 : index
    %c0_11 = arith.constant 0 : index
    %24 = vector.load %arg5[%c0_9, %c0_10, %c0_11] : memref<1x8x128xf32, #tpu.memory_space<vmem>>, vector<1x8x128xf32>
    %25 = vector.shape_cast %24 : vector<1x8x128xf32> to vector<8x128xf32>
    %26 = vector.shape_cast %23 : vector<8x128xf32> to vector<1x8x128xf32>
    tpu.vector_store %arg5[%c0_9, %c0_10, %c0_11], %26 {strides = array<i32>} : memref<1x8x128xf32, #tpu.memory_space<vmem>>, vector<1x8x128xf32>,
    return
  }
  func.func @transform_0(%arg0: i32, %arg1: i32) -> (i32, i32, i32) {
    %c0_i32 = arith.constant 0 : i32
    %c0_i32_0 = arith.constant 0 : i32
    %c0_i32_1 = arith.constant 0 : i32
    return %arg0, %c0_i32, %c0_i32_0 : i32, i32, i32
  }
  func.func @transform_1(%arg0: i32, %arg1: i32) -> (i32, i32) {
    %c0_i32 = arith.constant 0 : i32
    %c0_i32_0 = arith.constant 0 : i32
    %c0_i32_1 = arith.constant 0 : i32
    return %c0_i32, %c0_i32_0 : i32, i32
  }
  func.func @transform_2(%arg0: i32, %arg1: i32) -> (i32, i32) {
    %c0_i32 = arith.constant 0 : i32
    %c0_i32_0 = arith.constant 0 : i32
    %c0_i32_1 = arith.constant 0 : i32
    return %c0_i32, %c0_i32_0 : i32, i32
  }
  func.func @transform_3(%arg0: i32, %arg1: i32) -> (i32, i32, i32) {
    %c0_i32 = arith.constant 0 : i32
    %c0_i32_0 = arith.constant 0 : i32
    return %arg0, %arg1, %c0_i32 : i32, i32, i32
  }
}

</mosaic_0001>

<llo_original>
// kernel: tpu_custom_call.1
$region0: #{tpu_custom_call.1}
  #allocation0 [shape = 'u32[]', space=smem, size = 0x4, offset = 0x4, fixed_abs, tag = 'smem constant byte address 0x4 - core index']
  #allocation1 [shape = 'u32[144,128]{1,0:T(1,128)}', space=vmem, size = 0x12000, scoped, tag = 'internal scratch']
  #allocation2 [shape = 'bf16[8,128]{1,0:T(8,128)(2,1)}', space=vmem, size = 0x800, scoped, tag = 'scratch operand']
  #allocation3 [shape = 'bf16[8,128]{1,0:T(8,128)(2,1)}', space=vmem, size = 0x800, scoped, tag = 'scratch operand']
  #allocation4 [shape = 'bf16[8,128]{1,0:T(8,128)(2,1)}', space=vmem, size = 0x800, scoped, tag = 'scratch operand']
  %s0 = inlined_call_operand.hbm [shape: bf16[2,8,32], index: 0, kind: input, shape index: {}]
  %s1 = inlined_call_operand.hbm [shape: bf16[32,384], index: 1, kind: input, shape index: {}]
  %s2 = inlined_call_operand.vmem [shape: f32[1,384], index: 2, kind: input, shape index: {}]
  %s3 = inlined_call_operand.hbm [shape: f32[2,8,128], index: 3, kind: output, shape index: {}]
  %s4 = sld [smem:[#allocation0]]
  $region57: #{tpu_custom_call.1} parent=0
    _
  %s6 = ssub.s32 1, %s4
  %s7 = scalar_select 0, %s6, %s4
  $region1: #{tpu_custom_call.1} parent=0
    #allocation5 [shape = 'u8[4096]{0}', space=vmem, size = 0x1000, scoped, tag = 'input window, operand 0']
    #allocation6 [shape = 's32[2]{0}', space=sflag, size = 0x8, scoped, tag = 'scoped memory for tpu_custom_call.1']
    #allocation7 [shape = 's32[2]{0}', space=sflag, size = 0x8, scoped, tag = 'scoped memory for tpu_custom_call.1']
    #allocation8 [shape = 'u8[24576]{0}', space=vmem, size = 0x6000, scoped, tag = 'input window, operand 1, single buffered']
    #allocation9 [shape = 's32[1]{0}', space=sflag, size = 0x4, scoped, tag = 'scoped memory for tpu_custom_call.1']
    #allocation10 [shape = 'u8[8192]{0}', space=vmem, size = 0x2000, scoped, tag = 'output window, operand 0']
    %8 = vsyncpa [#allocation6], 0
    %s9 = scalar_lea.sflag [#allocation6], 1
    %10 = vsyncpa %s9, 0
    %11 = vsyncpa [#allocation9], 0
    %12 = vsyncpa [#allocation7], 0
    %s13 = scalar_lea.sflag [#allocation7], 1
    %14 = vsyncpa %s13, 0
    loop: start=0, step=1, limit=4
    $region2: #{tpu_custom_call.1} parent=1 // loop_pre_header
      _
    $region3: #{tpu_custom_call.1} parent=1 // loop_header
      %s16 = sphi 0, %s20
      %p17 = scmp.ge.s32.totalorder %s16, 4
      %s23 = sphi 0, %s35
      %s24 = sphi 0, %s31
      %s25 = sphi 0, %s23
      %s26 = sphi 0, %s24
      %s27 = sphi 0, %s25
      %s28 = sphi 0, %s26
      %s38 = sphi 0, %s40
      %s41 = sphi 0, %s38
      %s42 = sphi 0, %s41
      %s58 = sphi 0, %s42
      %s62 = sphi 0, %s62
      %s64 = sphi 0, %s62
      %s65 = sphi 0, %s64
      %s79 = sphi 0, %s65
      %s83 = sphi 0, %s83
      %s85 = sphi 0, %s83
      %s86 = sphi 0, %s85
      %s100 = sphi 0, %s86
      %s108 = sphi 0, %s110
      %s111 = sphi 0, %s108
      %s112 = sphi 0, %s111
      %s128 = sphi 0, %s112
    $region4: #{tpu_custom_call.1} parent=1 // loop_header_branch
      %19 = sbr.rel (%p17) target = $region8
    $region5: #{tpu_custom_call.1} parent=1 // loop_body
      %s21 = ssub.s32 %s16, 1
      %s22 = ssub.s32 %s16, 2
      %s29 = sadd.s32 1, %s24
      %p30 = scmp.ge.s32.totalorder %s29, 1
      %s31 = scalar_select %p30, 0, %s29
      %s32 = sadd.s32 1, %s23
      %s33 = scalar_select %p30, %s32, %s23
      %p34 = scmp.ge.s32.totalorder %s33, 2
      %s35 = scalar_select %p34, 0, %s33
      %s36 = ssub.s32 %s23, %s35
      %p37 = scmp.eq.s32.totalorder %s36, 0
      %s39 = sadd.s32 %s38, 1
      %s40 = scalar_select %p37, %s38, %s39
      %p43 = pneg %p37
      %p44 = scmp.eq.s32.totalorder %s16, 1
      %p45 = por %p43, %p44
      %p46 = scmp.ne.s32.totalorder %s38, %s41
      %p47 = scmp.eq.s32.totalorder %s16, 0
      %p48 = por %p46, %p47
      %p49 = scmp.ne.s32.totalorder %s38, %s41
      %p50 = scmp.eq.s32.totalorder %s21, 1
      %p51 = por %p49, %p50
      %p52 = scmp.ne.s32.totalorder %s41, %s42
      %p53 = scmp.eq.s32.totalorder %s21, 0
      %p54 = por %p52, %p53
      %p55 = scmp.ne.s32.totalorder %s41, %s42
      %p56 = scmp.eq.s32.totalorder %s22, 1
      %p57 = por %p55, %p56
      %p59 = scmp.ne.s32.totalorder %s42, %s58
      %p60 = scmp.eq.s32.totalorder %s22, 0
      %p61 = por %p59, %p60
      %s63 = sadd.s32 %s62, 1
      %p66 = scmp.eq.s32.totalorder %s16, 1
      %p67 = scmp.ne.s32.totalorder %s62, %s64
      %p68 = scmp.eq.s32.totalorder %s16, 0
      %p69 = por %p67, %p68
      %p70 = scmp.ne.s32.totalorder %s62, %s64
      %p71 = scmp.eq.s32.totalorder %s21, 1
      %p72 = por %p70, %p71
      %p73 = scmp.ne.s32.totalorder %s64, %s65
      %p74 = scmp.eq.s32.totalorder %s21, 0
      %p75 = por %p73, %p74
      %p76 = scmp.ne.s32.totalorder %s64, %s65
      %p77 = scmp.eq.s32.totalorder %s22, 1
      %p78 = por %p76, %p77
      %p80 = scmp.ne.s32.totalorder %s65, %s79
      %p81 = scmp.eq.s32.totalorder %s22, 0
      %p82 = por %p80, %p81
      %s84 = sadd.s32 %s83, 1
      %p87 = scmp.eq.s32.totalorder %s16, 1
      %p88 = scmp.ne.s32.totalorder %s83, %s85
      %p89 = scmp.eq.s32.totalorder %s16, 0
      %p90 = por %p88, %p89
      %p91 = scmp.ne.s32.totalorder %s83, %s85
      %p92 = scmp.eq.s32.totalorder %s21, 1
      %p93 = por %p91, %p92
      %p94 = scmp.ne.s32.totalorder %s85, %s86
      %p95 = scmp.eq.s32.totalorder %s21, 0
      %p96 = por %p94, %p95
      %p97 = scmp.ne.s32.totalorder %s85, %s86
      %p98 = scmp.eq.s32.totalorder %s22, 1
      %p99 = por %p97, %p98
      %p101 = scmp.ne.s32.totalorder %s86, %s100
      %p102 = scmp.eq.s32.totalorder %s22, 0
      %p103 = por %p101, %p102
      %s104 = ssub.s32 %s23, %s35
      %s105 = ssub.s32 %s24, %s31
      %s106 = sor.u32 %s104, %s105
      %p107 = scmp.eq.s32.totalorder %s106, 0
      %s109 = sadd.s32 %s108, 1
      %s110 = scalar_select %p107, %s108, %s109
      %p113 = pneg %p107
      %p114 = scmp.eq.s32.totalorder %s16, 1
      %p115 = por %p113, %p114
      %p116 = scmp.ne.s32.totalorder %s108, %s111
      %p117 = scmp.eq.s32.totalorder %s16, 0
      %p118 = por %p116, %p117
      %p119 = scmp.ne.s32.totalorder %s108, %s111
      %p120 = scmp.eq.s32.totalorder %s21, 1
      %p121 = por %p119, %p120
      %p122 = scmp.ne.s32.totalorder %s111, %s112
      %p123 = scmp.eq.s32.totalorder %s21, 0
      %p124 = por %p122, %p123
      %p125 = scmp.ne.s32.totalorder %s111, %s112
      %p126 = scmp.eq.s32.totalorder %s22, 1
      %p127 = por %p125, %p126
      %p129 = scmp.ne.s32.totalorder %s112, %s128
      %p130 = scmp.eq.s32.totalorder %s22, 0
      %p131 = por %p129, %p130
      %p132 = scmp.le.s32.totalorder 1, %s16
      %p133 = scmp.lt.s32.totalorder %s16, 3
      %p134 = pnand %p132, %p133
      %p135 = pneg %p134
      // Predicated region
      $region9: #{tpu_custom_call.1} parent=5 // pred_check
        _
      $region10: #{tpu_custom_call.1} parent=5 // pred_check_branch
        %137 = sbr.rel (%p134) target = $region12
      $region11: #{tpu_custom_call.1} parent=5 // pred_region
        %s138 = ssub.s32 %s16, 1
        // Predicated region
        $region13: #{tpu_custom_call.1} parent=11 // pred_check
          %p139 = pneg %p75
        $region14: #{tpu_custom_call.1} parent=11 // pred_check_branch
          %141 = sbr.rel (%p139) target = $region16
        $region15: #{tpu_custom_call.1} parent=11 // pred_region
          %s143 = ssub.s32 768, 768
          %144 = vsyncadd [#allocation9], %s143
          %s145 = sshll.u32 [#allocation8], 4
          %s146 = int_to_ptr.vmem [resolvable:$true] %s145
          %151 = dma.hbm_to_vmem [thread:$0]  %s1, 768, %s146, [#allocation9], 192, 192, 12
        $region16: #{tpu_custom_call.1} parent=11 // pred_fallthru
          _
        // Predicated region
        $region17: #{tpu_custom_call.1} parent=11 // pred_check
          %p152 = pneg %p96
        $region18: #{tpu_custom_call.1} parent=11 // pred_check_branch
          %154 = sbr.rel (%p152) target = $region20
        $region19: #{tpu_custom_call.1} parent=11 // pred_region
          _
        $region20: #{tpu_custom_call.1} parent=11 // pred_fallthru
          _
      $region12: #{tpu_custom_call.1} parent=5 // pred_fallthru
        _
      %p155 = scmp.lt.s32.totalorder %s16, 2
      // Predicated region
      $region21: #{tpu_custom_call.1} parent=5 // pred_check
        %p156 = pneg %p155
      $region22: #{tpu_custom_call.1} parent=5 // pred_check_branch
        %158 = sbr.rel (%p156) target = $region24
      $region23: #{tpu_custom_call.1} parent=5 // pred_region
        // Predicated region
        $region25: #{tpu_custom_call.1} parent=23 // pred_check
          %p159 = pneg %p48
        $region26: #{tpu_custom_call.1} parent=23 // pred_check_branch
          %161 = sbr.rel (%p159) target = $region28
        $region27: #{tpu_custom_call.1} parent=23 // pred_region
          %s162 = sand.u32 %s38, 1
          %s163 = scalar_lea.sflag [#allocation6], %s162
          %s164 = sand.u32 %s38, 1
          %s165 = smul.addr %s164, 4
          %s166 = scalar_lea.vmem [#allocation5], %s165
          %s168 = ssub.s32 64, 64
          %169 = vsyncadd %s163, %s168
          %s170 = smul.addr %s23, 64
          %s171 = scalar_lea.hbm %s0, %s170
          %s173 = sshll.u32 %s166, 4
          %s174 = int_to_ptr.vmem [resolvable:$true] %s173
          %176 = dma.hbm_to_vmem [thread:$0]  %s171, 64, %s174, %s163
        $region28: #{tpu_custom_call.1} parent=23 // pred_fallthru
          _
      $region24: #{tpu_custom_call.1} parent=5 // pred_fallthru
        _
      %p177 = scmp.le.s32.totalorder 1, %s16
      %p178 = scmp.lt.s32.totalorder %s16, 3
      %p179 = pnand %p177, %p178
      %p180 = pneg %p179
      // Predicated region
      $region29: #{tpu_custom_call.1} parent=5 // pred_check
        _
      $region30: #{tpu_custom_call.1} parent=5 // pred_check_branch
        %182 = sbr.rel (%p179) target = $region32
      $region31: #{tpu_custom_call.1} parent=5 // pred_region
        %s183 = ssub.s32 %s16, 1
        %s184 = sand.u32 %s41, 1
        %s185 = scalar_lea.sflag [#allocation6], %s184
        %s186 = sand.u32 %s41, 1
        %s187 = smul.addr %s186, 4
        %s188 = scalar_lea.vmem [#allocation5], %s187
        // Predicated region
        $region33: #{tpu_custom_call.1} parent=31 // pred_check
          %p189 = pneg %p54
        $region34: #{tpu_custom_call.1} parent=31 // pred_check_branch
          %191 = sbr.rel (%p189) target = $region36
        $region35: #{tpu_custom_call.1} parent=31 // pred_region
          %192 = dma.done %s185, 64
        $region36: #{tpu_custom_call.1} parent=31 // pred_fallthru
          _
        // Predicated region
        $region37: #{tpu_custom_call.1} parent=31 // pred_check
          %p193 = pneg %p75
        $region38: #{tpu_custom_call.1} parent=31 // pred_check_branch
          %195 = sbr.rel (%p193) target = $region40
        $region39: #{tpu_custom_call.1} parent=31 // pred_region
          %196 = dma.done [#allocation9], 768
        $region40: #{tpu_custom_call.1} parent=31 // pred_fallthru
          _
        %s197 = sand.u32 %s41, 1
        %s198 = scalar_lea.sflag [#allocation6], %s197
        %s199 = sand.u32 %s41, 1
        %s200 = smul.addr %s199, 4
        %s201 = scalar_lea.vmem [#allocation5], %s200
        %p202 = pneg %p54
        %p203 = pneg %p51
        %p204 = pneg %p75
        %p205 = pneg %p72
        %p206 = pneg %p96
        %p207 = pneg %p93
        %p208 = pneg %p124
        %p209 = pneg %p121
        %s210 = sand.u32 %s111, 1
        %s211 = scalar_lea.sflag [#allocation7], %s210
        %s212 = sand.u32 %s111, 1
        %s213 = smul.addr %s212, 8
        %s214 = scalar_lea.vmem [#allocation10], %s213
        %p216 = scmp.eq.s32.totalorder %s26, 0
        // Predicated region
        $region41: #{tpu_custom_call.1} parent=31 // pred_check
          %p217 = pneg %p216
        $region42: #{tpu_custom_call.1} parent=31 // pred_check_branch
          %219 = sbr.rel (%p217) target = $region44
        $region43: #{tpu_custom_call.1} parent=31 // pred_region
          %v220 = vld [vmem:[%s188] sm:$0xf]
          %v221 = vld [vmem:[#allocation8] sm:$0xff]
          %v222 = vld [vmem:[#allocation8 + $0x8] sm:$0xf]
          %v223 = vld [vmem:[#allocation8 + $0xc] sm:$0xff]
          %v224 = vld [vmem:[#allocation8 + $0x14] sm:$0xf]
          %v225 = vld [vmem:[#allocation8 + $0x18] sm:$0xff]
          %v226 = vld [vmem:[#allocation8 + $0x20] sm:$0xf]
          %v227 = vld [vmem:[#allocation8 + $0x24] sm:$0xff]
          %v228 = vld [vmem:[#allocation8 + $0x2c] sm:$0xf]
          %v229 = vld [vmem:[%s2] sm:$0x7]
          %v231 = vlaneseq
          %v232 = vshrl.u32 %v231, 7
          %v233 = vsub.s32 0, %v232
          %v234 = vrot.slane %v229, %v233
          %v235 = vlaneseq
          %v236 = vshrl.u32 %v235, 7
          %v237 = vsub.s32 1, %v236
          %v238 = vrot.slane %v229, %v237
          %v239 = vlaneseq
          %v240 = vshrl.u32 %v239, 7
          %v241 = vsub.s32 2, %v240
          %v242 = vrot.slane %v229, %v241
          %v254 = vunpack.c.l.b16 %v221
          %v255 = vunpack.c.h.b16 %v221
          %v256 = vunpack.c.l.b16 %v222
          %v257 = vunpack.c.l.b16 %v223
          %v258 = vunpack.c.h.b16 %v223
          %v259 = vunpack.c.l.b16 %v224
          %v260 = vunpack.c.l.b16 %v225
          %v261 = vunpack.c.h.b16 %v225
          %v262 = vunpack.c.l.b16 %v226
          %v263 = vunpack.c.l.b16 %v227
          %v264 = vunpack.c.h.b16 %v227
          %v265 = vunpack.c.l.b16 %v228
          %v266 = vpack.c.b16 %v257, %v254
          %v267 = vpack.c.b16 %v258, %v255
          %v268 = vpack.c.b16 %v259, %v256
          %v269 = vpack.c.b16 %v263, %v260
          %v270 = vpack.c.b16 %v264, %v261
          %v271 = vpack.c.b16 %v265, %v262
          %vm278 = vcmask 261120
          %v280 = vsel %vm278, %v220, 0
          %282 = vmatprep.subr.bf16.mxu0 0
          %283 = vmatpush1.bf16.msra.mxu0 0
          %284 = vmatprep.subr.bf16.mxu0 0
          %285 = vmatpush1.bf16.msra.mxu0 0
          %286 = vmatprep.subr.bf16.mxu0 0
          %287 = vmatpush1.bf16.msra.mxu0 0
          %288 = vmatprep.subr.bf16.mxu0 0
          %289 = vmatpush1.bf16.msra.mxu0 0
          %290 = vmatprep.subr.bf16.mxu0 0
          %291 = vmatpush1.bf16.msra.mxu0 0
          %292 = vmatprep.subr.bf16.mxu0 0
          %293 = vmatpush1.bf16.msra.mxu0 0
          %294 = vmatprep.subr.bf16.mxu0 %v270
          %295 = vmatpush1.bf16.msra.mxu0 %v269
          %296 = vmatprep.subr.bf16.mxu0 %v267
          %297 = vmatpush1.bf16.msra.mxu0 %v266
          %298 = vmatprep.subr.bf16.mxu0 0
          %299 = vmatpush2.bf16.msra.mxu0 0
          %300 = vmatprep.subr.bf16.mxu0 0
          %301 = vmatpush2.bf16.msra.mxu0 0
          %302 = vmatprep.subr.bf16.mxu0 0
          %303 = vmatpush2.bf16.msra.mxu0 0
          %304 = vmatprep.subr.bf16.mxu0 0
          %305 = vmatpush2.bf16.msra.mxu0 0
          %306 = vmatprep.subr.bf16.mxu0 0
          %307 = vmatpush2.bf16.msra.mxu0 0
          %308 = vmatprep.subr.bf16.mxu0 0
          %309 = vmatpush2.bf16.msra.mxu0 0
          %310 = vmatprep.subr.bf16.mxu0 0
          %311 = vmatpush2.bf16.msra.mxu0 0
          %312 = vmatprep.subr.bf16.mxu0 0
          %313 = vmatpush2.bf16.msra.mxu0 0
          %314 = vmatprep.mubr.bf16.mxu0 0
          %315 = vmatmul.mubr.bf16.gmra.mxu0 %v280
          %v316 = vpop.f32.mrf.mxu0
          %v317 = vadd.f32 %v234, %v316
          %v318 = vpop.f32.mrf.mxu0
          %v319 = vadd.f32 %v238, %v318
          %v320 = vpop.f32.mrf.mxu0
          %v321 = vpop.f32.mrf.mxu0
          %322 = vdwg.mxu0
          %323 = vmatprep.subr.bf16.mxu0 0
          %324 = vmatpush1.bf16.msra.mxu0 0
          %325 = vmatprep.subr.bf16.mxu0 0
          %326 = vmatpush1.bf16.msra.mxu0 0
          %327 = vmatprep.subr.bf16.mxu0 0
          %328 = vmatpush1.bf16.msra.mxu0 0
          %329 = vmatprep.subr.bf16.mxu0 0
          %330 = vmatpush1.bf16.msra.mxu0 0
          %331 = vmatprep.subr.bf16.mxu0 0
          %332 = vmatpush1.bf16.msra.mxu0 0
          %333 = vmatprep.subr.bf16.mxu0 0
          %334 = vmatpush1.bf16.msra.mxu0 0
          %335 = vmatprep.subr.bf16.mxu0 0
          %336 = vmatpush1.bf16.msra.mxu0 %v271
          %337 = vmatprep.subr.bf16.mxu0 0
          %338 = vmatpush1.bf16.msra.mxu0 %v268
          %339 = vmatprep.subr.bf16.mxu0 0
          %340 = vmatpush2.bf16.msra.mxu0 0
          %341 = vmatprep.subr.bf16.mxu0 0
          %342 = vmatpush2.bf16.msra.mxu0 0
          %343 = vmatprep.subr.bf16.mxu0 0
          %344 = vmatpush2.bf16.msra.mxu0 0
          %345 = vmatprep.subr.bf16.mxu0 0
          %346 = vmatpush2.bf16.msra.mxu0 0
          %347 = vmatprep.subr.bf16.mxu0 0
          %348 = vmatpush2.bf16.msra.mxu0 0
          %349 = vmatprep.subr.bf16.mxu0 0
          %350 = vmatpush2.bf16.msra.mxu0 0
          %351 = vmatprep.subr.bf16.mxu0 0
          %352 = vmatpush2.bf16.msra.mxu0 0
          %353 = vmatprep.subr.bf16.mxu0 0
          %354 = vmatpush2.bf16.msra.mxu0 0
          %355 = vmatprep.mubr.bf16.mxu0 0
          %356 = vmatmul.mubr.bf16.gmra.mxu0 %v280
          %v357 = vpop.f32.mrf.mxu0
          %v358 = vadd.f32 %v242, %v357
          %v359 = vpop.f32.mrf.mxu0
          %v360 = vpop.f32.mrf.mxu0
          %v361 = vpop.f32.mrf.mxu0
          %362 = vdwg.mxu0
          %v363 = vpack.c.bf16 %v317, %v317
          %364 = vst [vmem:[#allocation2] sm:$0xf] %v363
          %v365 = vpack.c.bf16 %v319, %v319
          %366 = vst [vmem:[#allocation3] sm:$0xf] %v365
          %v367 = vpack.c.bf16 %v358, %v358
          %368 = vst [vmem:[#allocation4] sm:$0xf] %v367
        $region44: #{tpu_custom_call.1} parent=31 // pred_fallthru
          _
        %s369 = smul.u32 %s26, 8
        %s370 = sshra.s32 %s369, 3
        %s371 = sand.u32 %s369, 7
        %s372 = smul.addr %s370, 4
        %s373 = scalar_lea.vmem [#allocation2], %s372
        %v374 = vld [vmem:[%s373] sm:$0xf]
        %v375 = vld [vmem:[#allocation3] sm:$0xf]
        %376 = vmatprep.subr.bf16.mxu0 0
        %377 = vmatpush1.bf16.xpose.msra.mxu0 0
        %378 = vmatprep.subr.bf16.mxu0 0
        %379 = vmatpush1.bf16.xpose.msra.mxu0 0
        %380 = vmatprep.subr.bf16.mxu0 0
        %381 = vmatpush1.bf16.xpose.msra.mxu0 0
        %382 = vmatprep.subr.bf16.mxu0 0
        %383 = vmatpush1.bf16.xpose.msra.mxu0 0
        %384 = vmatprep.subr.bf16.mxu0 0
        %385 = vmatpush1.bf16.xpose.msra.mxu0 0
        %386 = vmatprep.subr.bf16.mxu0 0
        %387 = vmatpush1.bf16.xpose.msra.mxu0 0
        %388 = vmatprep.subr.bf16.mxu0 0
        %389 = vmatpush1.bf16.xpose.msra.mxu0 0
        %390 = vmatprep.subr.bf16.mxu0 0
        %391 = vmatpush1.bf16.xpose.msra.mxu0 %v375
        %392 = vmatprep.subr.bf16.mxu0 0
        %393 = vmatpush2.bf16.xpose.msra.mxu0 0
        %394 = vmatprep.subr.bf16.mxu0 0
        %395 = vmatpush2.bf16.xpose.msra.mxu0 0
        %396 = vmatprep.subr.bf16.mxu0 0
        %397 = vmatpush2.bf16.xpose.msra.mxu0 0
        %398 = vmatprep.subr.bf16.mxu0 0
        %399 = vmatpush2.bf16.xpose.msra.mxu0 0
        %400 = vmatprep.subr.bf16.mxu0 0
        %401 = vmatpush2.bf16.xpose.msra.mxu0 0
        %402 = vmatprep.subr.bf16.mxu0 0
        %403 = vmatpush2.bf16.xpose.msra.mxu0 0
        %404 = vmatprep.subr.bf16.mxu0 0
        %405 = vmatpush2.bf16.xpose.msra.mxu0 0
        %406 = vmatprep.subr.bf16.mxu0 0
        %407 = vmatpush2.bf16.xpose.msra.mxu0 0
        %408 = vmatprep.mubr.bf16.mxu0 0
        %409 = vmatmul.mubr.bf16.gmra.mxu0 %v374
        %v410 = vpop.f32.mrf.mxu0
        %v411 = vadd.f32 0.0, %v410
        %v412 = vpop.f32.mrf.mxu0
        %v413 = vpop.f32.mrf.mxu0
        %v414 = vpop.f32.mrf.mxu0
        %415 = vdwg.mxu0
        %v416 = vmul.f32 %v411, 0.17677669
        %vm417 = vcmask 64512
        %v418 = vsel %vm417, %v416, -inf
        %419 = vmax.xlane.f32.xlu0 %v418
        %v420 = vpop.xlane.xlu0 %419
        %v421 = vsub.f32 %v416, %v420
        %v422 = vmul.f32 %v421, 1.442695
        %v423 = vpow.pop %v422
        %v424 = vsel %vm417, %v423, 0.0
        %425 = vadd.xlane.f32.xlu0 %v424
        %v426 = vpop.xlane.xlu0 %425
        %v427 = vrcp.pop %v426
        %v428 = vmul.f32 %v423, %v427
        %v429 = vpack.c.bf16 %v428, %v428
        %v430 = vld [vmem:[#allocation4] sm:$0xf]
        %v432 = vsel %vm417, %v429, 0
        %vm434 = vcmask 1043456
        %v436 = vsel %vm434, %v430, 0
        %438 = vmatprep.subr.bf16.mxu0 0
        %439 = vmatpush1.bf16.msra.mxu0 0
        %440 = vmatprep.subr.bf16.mxu0 0
        %441 = vmatpush1.bf16.msra.mxu0 0
        %442 = vmatprep.subr.bf16.mxu0 0
        %443 = vmatpush1.bf16.msra.mxu0 0
        %444 = vmatprep.subr.bf16.mxu0 0
        %445 = vmatpush1.bf16.msra.mxu0 0
        %446 = vmatprep.subr.bf16.mxu0 0
        %447 = vmatpush1.bf16.msra.mxu0 0
        %448 = vmatprep.subr.bf16.mxu0 0
        %449 = vmatpush1.bf16.msra.mxu0 0
        %450 = vmatprep.subr.bf16.mxu0 0
        %451 = vmatpush1.bf16.msra.mxu0 0
        %452 = vmatprep.subr.bf16.mxu0 0
        %453 = vmatpush1.bf16.msra.mxu0 %v436
        %454 = vmatprep.subr.bf16.mxu0 0
        %455 = vmatpush2.bf16.msra.mxu0 0
        %456 = vmatprep.subr.bf16.mxu0 0
        %457 = vmatpush2.bf16.msra.mxu0 0
        %458 = vmatprep.subr.bf16.mxu0 0
        %459 = vmatpush2.bf16.msra.mxu0 0
        %460 = vmatprep.subr.bf16.mxu0 0
        %461 = vmatpush2.bf16.msra.mxu0 0
        %462 = vmatprep.subr.bf16.mxu0 0
        %463 = vmatpush2.bf16.msra.mxu0 0
        %464 = vmatprep.subr.bf16.mxu0 0
        %465 = vmatpush2.bf16.msra.mxu0 0
        %466 = vmatprep.subr.bf16.mxu0 0
        %467 = vmatpush2.bf16.msra.mxu0 0
        %468 = vmatprep.subr.bf16.mxu0 0
        %469 = vmatpush2.bf16.msra.mxu0 0
        %470 = vmatprep.mubr.bf16.mxu0 0
        %471 = vmatmul.mubr.bf16.gmra.mxu0 %v432
        %v472 = vpop.f32.mrf.mxu0
        %v473 = vadd.f32 0.0, %v472
        %v474 = vpop.f32.mrf.mxu0
        %v475 = vpop.f32.mrf.mxu0
        %v476 = vpop.f32.mrf.mxu0
        %477 = vdwg.mxu0
        %478 = vst [vmem:[%s214] sm:$0xff] %v473
        %s479 = sand.u32 %s111, 1
        %s480 = scalar_lea.sflag [#allocation7], %s479
        %s481 = sand.u32 %s111, 1
        %s482 = smul.addr %s481, 8
        %s483 = scalar_lea.vmem [#allocation10], %s482
        // Predicated region
        $region45: #{tpu_custom_call.1} parent=31 // pred_check
          %p484 = pneg %p121
        $region46: #{tpu_custom_call.1} parent=31 // pred_check_branch
          %486 = sbr.rel (%p484) target = $region48
        $region47: #{tpu_custom_call.1} parent=31 // pred_region
          %s488 = ssub.s32 128, 128
          %489 = vsyncadd %s480, %s488
          %s490 = sadd.s32 %s26, %s25
          %s491 = smul.addr %s490, 128
          %s492 = scalar_lea.hbm %s3, %s491
          %s494 = sshll.u32 %s483, 4
          %s495 = int_to_ptr.vmem [resolvable:$true] %s494
          %497 = dma.vmem_to_hbm [thread:$0]  %s495, 128, %s492, %s480
        $region48: #{tpu_custom_call.1} parent=31 // pred_fallthru
          _
      $region32: #{tpu_custom_call.1} parent=5 // pred_fallthru
        _
      %p498 = scmp.le.s32.totalorder 2, %s16
      // Predicated region
      $region49: #{tpu_custom_call.1} parent=5 // pred_check
        %p499 = pneg %p498
      $region50: #{tpu_custom_call.1} parent=5 // pred_check_branch
        %501 = sbr.rel (%p499) target = $region52
      $region51: #{tpu_custom_call.1} parent=5 // pred_region
        %s502 = ssub.s32 %s16, 2
        // Predicated region
        $region53: #{tpu_custom_call.1} parent=51 // pred_check
          %p503 = pneg %p127
        $region54: #{tpu_custom_call.1} parent=51 // pred_check_branch
          %505 = sbr.rel (%p503) target = $region56
        $region55: #{tpu_custom_call.1} parent=51 // pred_region
          %s506 = sand.u32 %s112, 1
          %s507 = scalar_lea.sflag [#allocation7], %s506
          %s508 = sand.u32 %s112, 1
          %s509 = smul.addr %s508, 8
          %s510 = scalar_lea.vmem [#allocation10], %s509
          %511 = dma.done %s507, 128
        $region56: #{tpu_custom_call.1} parent=51 // pred_fallthru
          _
      $region52: #{tpu_custom_call.1} parent=5 // pred_fallthru
        _
    $region6: #{tpu_custom_call.1} parent=1 // loop_footer
      %s20 = sadd.s32 1, %s16
    $region7: #{tpu_custom_call.1} parent=1 // loop_footer_branch
      %15 = sbr.rel target = $region3
    $region8: #{tpu_custom_call.1} parent=1 // loop_exit
      _
    %512 = vsyncpa [#allocation6], 1
    %s513 = scalar_lea.sflag [#allocation6], 1
    %514 = vsyncpa %s513, 1
    %515 = vsyncpa [#allocation9], 1
    %516 = vsyncpa [#allocation7], 1
    %s517 = scalar_lea.sflag [#allocation7], 1
    %518 = vsyncpa %s517, 1

</llo_original>
